<compile_context>
chip_gen: v7x
topology: tpu7x:2x2x1
jax: 0.10.0
libtpu: 0.0.40
codegen_flags: <defaults>
</compile_context>

<pallas_src>
import functools

import jax
import jax.numpy as jnp
from jax.experimental import pallas as pl
from jax.experimental.pallas import tpu as pltpu

INPUT_SIZE = 355
H1, H2, H3, OUT = 128, 512, 64, 1


def _round_up(n, m):
    return ((n + m - 1) // m) * m


IN_PAD = _round_up(INPUT_SIZE, 128)  # 384


def _mlp_kernel(x_ref, w1_ref, b1_ref, w2_ref, b2_ref,
                w3_ref, b3_ref, w4_ref, b4_ref, o_ref):
    # Layer 1: (TB, 384)bf16 @ (384, 128)bf16 -> f32 acc, + bias, ReLU
    h = jnp.dot(x_ref[...], w1_ref[...], preferred_element_type=jnp.float32)
    h = jnp.maximum(h + b1_ref[...], 0.0)
    # Layer 2: (TB, 128) @ (128, 512)
    h = jnp.dot(h.astype(jnp.bfloat16), w2_ref[...],
                preferred_element_type=jnp.float32)
    h = jnp.maximum(h + b2_ref[...], 0.0)
    # Layer 3: (TB, 512) @ (512, 64)
    h = jnp.dot(h.astype(jnp.bfloat16), w3_ref[...],
                preferred_element_type=jnp.float32)
    h = jnp.maximum(h + b3_ref[...], 0.0)
    # Layer 4: single output unit -> VPU multiply + lane reduce (skip the
    # lane-sparse 1-column MXU matmul). Result stored lane-dense as (1, TB).
    prod = h * w4_ref[...]                                  # (TB, 64) f32, VPU
    out_row = jnp.sum(prod, axis=-1) + b4_ref[0, 0]         # (TB,) XLU reduce
    o_ref[...] = out_row[None, :].astype(o_ref.dtype)       # (1, TB) lane-dense


@functools.partial(jax.jit, static_argnames=("block_b",))
def nn229_forward(x, params, block_b=256):
    """x: (B, 355) f32 -> (B, 1) f32.

    block_b: batch tile; keep it a multiple of 128 (128 on v5e, 256 on
    v6e/v7x). It is automatically clamped for small batches.
    """
    w1, b1, w2, b2, w3, b3, w4, b4 = params
    B = x.shape[0]

    # Clamp tile for tiny batches; keep multi-tile grids lane/MXU aligned.
    bb = min(block_b, _round_up(B, 16))
    if bb < B:
        bb = _round_up(bb, 128)
    B_pad = _round_up(B, bb)
    num_tiles = B_pad // bb

    # Pad batch to a tile multiple and features 355 -> 384; cast to bf16.
    xp = jnp.pad(x, ((0, B_pad - B), (0, IN_PAD - x.shape[1]))
                 ).astype(jnp.bfloat16)
    w1p = jnp.pad(w1, ((0, IN_PAD - w1.shape[0]), (0, 0))).astype(jnp.bfloat16)
    w2b = w2.astype(jnp.bfloat16)
    w3b = w3.astype(jnp.bfloat16)
    w4r = w4.reshape(1, H3)  # (64,1) -> (1,64) row for VPU broadcast, f32

    full = lambda shape: pl.BlockSpec(shape, lambda i: (0, 0))

    out = pl.pallas_call(
        _mlp_kernel,
        out_shape=jax.ShapeDtypeStruct((1, B_pad), jnp.float32),
        grid_spec=pltpu.PrefetchScalarGridSpec(
            num_scalar_prefetch=0,
            grid=(num_tiles,),
            in_specs=[
                pl.BlockSpec((bb, IN_PAD), lambda i: (i, 0)),  # x tile (bf16)
                full((IN_PAD, H1)), full((1, H1)),             # W1, b1
                full((H1, H2)),     full((1, H2)),             # W2, b2
                full((H2, H3)),     full((1, H3)),             # W3, b3
                full((1, H3)),      full((1, 1)),              # W4 row, b4
            ],
            out_specs=pl.BlockSpec((1, bb), lambda i: (0, i)),  # lane-dense
        ),
        compiler_params=pltpu.CompilerParams(
            dimension_semantics=("parallel",)),
    )(xp, w1p, b1, w2b, b2, w3b, b3, w4r, b4)

    return out[0, :B].reshape(B, OUT)


def init_params(key):
    """Deterministic init mimicking torch.nn.Linear (uniform ±1/sqrt(fan_in))."""
    dims = [(INPUT_SIZE, H1), (H1, H2), (H2, H3), (H3, OUT)]
    params = []
    for (fan_in, fan_out) in dims:
        key, kw, kb = jax.random.split(key, 3)
        bound = 1.0 / (fan_in ** 0.5)
        w = jax.random.uniform(kw, (fan_in, fan_out), jnp.float32, -bound, bound)
        b = jax.random.uniform(kb, (1, fan_out), jnp.float32, -bound, bound)
        params += [w, b]
    return tuple(params)


def reference_forward(x, params, match_kernel_bf16=True):
    """Pure-JAX reference. With match_kernel_bf16, mimics the kernel's bf16
    casts of x / W1-W3 / intermediate activations (f32 accumulation)."""
    w1, b1, w2, b2, w3, b3, w4, b4 = params
    if match_kernel_bf16:
        bf = lambda a: a.astype(jnp.bfloat16).astype(jnp.float32)
    else:
        bf = lambda a: a
    h = jnp.maximum(bf(x) @ bf(w1) + b1, 0.0)
    h = jnp.maximum(bf(h) @ bf(w2) + b2, 0.0)
    h = jnp.maximum(bf(h) @ bf(w3) + b3, 0.0)
    return h @ w4 + b4


if __name__ == "__main__":
    key = jax.random.PRNGKey(0)
    key, kx = jax.random.split(key)
    params = init_params(key)

    # Small-batch path (single clamped tile).
    x_small = jax.random.normal(kx, (8, INPUT_SIZE), jnp.float32)
    out_small = jax.block_until_ready(nn229_forward(x_small, params))
    ref_small = reference_forward(x_small, params)
    assert out_small.shape == (8, OUT)
    assert jnp.allclose(out_small, ref_small, atol=2e-2, rtol=2e-2), \
        "small-batch mismatch vs reference"

    # Multi-tile path with a ragged batch (exercises padding + grid + slicing).
    key, kx2 = jax.random.split(key)
    x_big = jax.random.normal(kx2, (300, INPUT_SIZE), jnp.float32)
    out_big = jax.block_until_ready(nn229_forward(x_big, params, block_b=128))
    ref_big = reference_forward(x_big, params)
    assert out_big.shape == (300, OUT)
    assert jnp.allclose(out_big, ref_big, atol=2e-2, rtol=2e-2), \
        "multi-tile mismatch vs reference"

    print("KERNEL_OK")
</pallas_src>

<mosaic_0001>
module attributes {stable_mosaic.version = 11 : i64} {
  func.func @_mlp_kernel(%arg0: i32, %arg1: memref<16x384xbf16, #tpu.memory_space<vmem>>, %arg2: memref<384x128xbf16, #tpu.memory_space<vmem>>, %arg3: memref<1x128xf32, #tpu.memory_space<vmem>>, %arg4: memref<128x512xbf16, #tpu.memory_space<vmem>>, %arg5: memref<1x512xf32, #tpu.memory_space<vmem>>, %arg6: memref<512x64xbf16, #tpu.memory_space<vmem>>, %arg7: memref<1x64xf32, #tpu.memory_space<vmem>>, %arg8: memref<1x64xf32, #tpu.memory_space<vmem>>, %arg9: memref<1x1xf32, #tpu.memory_space<vmem>>, %arg10: memref<1x16xf32, #tpu.memory_space<vmem>>) attributes {dimension_semantics = [#tpu.dimension_semantics<parallel>], iteration_bounds = array<i64: 1>, scalar_prefetch = 0 : i64, scratch_operands = 0 : i64, tpu.core_type = #tpu.core_type<tc>, window_params = [{transform_indices = @transform_0, window_bounds = array<i64: 16, 384>}, {pipeline_mode = #tpu.pipeline_mode<synchronous>, transform_indices = @transform_1, window_bounds = array<i64: 384, 128>}, {pipeline_mode = #tpu.pipeline_mode<synchronous>, transform_indices = @transform_2, window_bounds = array<i64: 1, 128>}, {pipeline_mode = #tpu.pipeline_mode<synchronous>, transform_indices = @transform_3, window_bounds = array<i64: 128, 512>}, {pipeline_mode = #tpu.pipeline_mode<synchronous>, transform_indices = @transform_4, window_bounds = array<i64: 1, 512>}, {pipeline_mode = #tpu.pipeline_mode<synchronous>, transform_indices = @transform_5, window_bounds = array<i64: 512, 64>}, {pipeline_mode = #tpu.pipeline_mode<synchronous>, transform_indices = @transform_6, window_bounds = array<i64: 1, 64>}, {pipeline_mode = #tpu.pipeline_mode<synchronous>, transform_indices = @transform_7, window_bounds = array<i64: 1, 64>}, {pipeline_mode = #tpu.pipeline_mode<synchronous>, transform_indices = @transform_8, window_bounds = array<i64: 1, 1>}, {transform_indices = @transform_9, window_bounds = array<i64: 1, 16>}]} {
    %c0 = arith.constant 0 : index
    %c0_0 = arith.constant 0 : index
    %0 = vector.load %arg1[%c0, %c0_0] : memref<16x384xbf16, #tpu.memory_space<vmem>>, vector<16x384xbf16>
    %c0_1 = arith.constant 0 : index
    %c0_2 = arith.constant 0 : index
    %1 = vector.load %arg2[%c0_1, %c0_2] : memref<384x128xbf16, #tpu.memory_space<vmem>>, vector<384x128xbf16>
    %cst = arith.constant dense<0.000000e+00> : vector<16x128xf32>
    %2 = tpu.matmul %0, %1, %cst {dimension_numbers = #tpu.dot_dimension_numbers<[1], [0], [0], [1], [0, 0, 1, 1], [], []>} : vector<16x384xbf16>, vector<384x128xbf16>, vector<16x128xf32> -> vector<16x128xf32>
    %c0_3 = arith.constant 0 : index
    %c0_4 = arith.constant 0 : index
    %3 = vector.load %arg3[%c0_3, %c0_4] : memref<1x128xf32, #tpu.memory_space<vmem>>, vector<1x128xf32>
    %4 = vector.broadcast %3 : vector<1x128xf32> to vector<16x128xf32>
    %5 = arith.addf %2, %4 : vector<16x128xf32>
    %cst_5 = arith.constant 0.000000e+00 : f32
    %6 = vector.broadcast %cst_5 : f32 to vector<16x128xf32>
    %7 = arith.maximumf %5, %6 : vector<16x128xf32>
    %8 = arith.truncf %7 : vector<16x128xf32> to vector<16x128xbf16>
    %c0_6 = arith.constant 0 : index
    %c0_7 = arith.constant 0 : index
    %9 = vector.load %arg4[%c0_6, %c0_7] : memref<128x512xbf16, #tpu.memory_space<vmem>>, vector<128x512xbf16>
    %cst_8 = arith.constant dense<0.000000e+00> : vector<16x512xf32>
    %10 = tpu.matmul %8, %9, %cst_8 {dimension_numbers = #tpu.dot_dimension_numbers<[1], [0], [0], [1], [0, 0, 1, 1], [], []>} : vector<16x128xbf16>, vector<128x512xbf16>, vector<16x512xf32> -> vector<16x512xf32>
    %c0_9 = arith.constant 0 : index
    %c0_10 = arith.constant 0 : index
    %11 = vector.load %arg5[%c0_9, %c0_10] : memref<1x512xf32, #tpu.memory_space<vmem>>, vector<1x512xf32>
    %12 = vector.broadcast %11 : vector<1x512xf32> to vector<16x512xf32>
    %13 = arith.addf %10, %12 : vector<16x512xf32>
    %cst_11 = arith.constant 0.000000e+00 : f32
    %14 = vector.broadcast %cst_11 : f32 to vector<16x512xf32>
    %15 = arith.maximumf %13, %14 : vector<16x512xf32>
    %16 = arith.truncf %15 : vector<16x512xf32> to vector<16x512xbf16>
    %c0_12 = arith.constant 0 : index
    %c0_13 = arith.constant 0 : index
    %17 = vector.load %arg6[%c0_12, %c0_13] : memref<512x64xbf16, #tpu.memory_space<vmem>>, vector<512x64xbf16>
    %cst_14 = arith.constant dense<0.000000e+00> : vector<16x64xf32>
    %18 = tpu.matmul %16, %17, %cst_14 {dimension_numbers = #tpu.dot_dimension_numbers<[1], [0], [0], [1], [0, 0, 1, 1], [], []>} : vector<16x512xbf16>, vector<512x64xbf16>, vector<16x64xf32> -> vector<16x64xf32>
    %c0_15 = arith.constant 0 : index
    %c0_16 = arith.constant 0 : index
    %19 = vector.load %arg7[%c0_15, %c0_16] : memref<1x64xf32, #tpu.memory_space<vmem>>, vector<1x64xf32>
    %20 = vector.broadcast %19 : vector<1x64xf32> to vector<16x64xf32>
    %21 = arith.addf %18, %20 : vector<16x64xf32>
    %cst_17 = arith.constant 0.000000e+00 : f32
    %22 = vector.broadcast %cst_17 : f32 to vector<16x64xf32>
    %23 = arith.maximumf %21, %22 : vector<16x64xf32>
    %c0_18 = arith.constant 0 : index
    %c0_19 = arith.constant 0 : index
    %24 = vector.load %arg8[%c0_18, %c0_19] : memref<1x64xf32, #tpu.memory_space<vmem>>, vector<1x64xf32>
    %25 = vector.broadcast %24 : vector<1x64xf32> to vector<16x64xf32>
    %26 = arith.mulf %23, %25 : vector<16x64xf32>
    %cst_20 = arith.constant dense<0.000000e+00> : vector<16xf32>
    %27 = vector.multi_reduction <add>, %26, %cst_20 [1] : vector<16x64xf32> to vector<16xf32>
    %c0_21 = arith.constant 0 : index
    %c0_22 = arith.constant 0 : index
    %28 = vector.load %arg9[%c0_21, %c0_22] : memref<1x1xf32, #tpu.memory_space<vmem>>, vector<1x1xf32>
    %29 = vector.extract %28[0, 0] : f32 from vector<1x1xf32>
    %30 = vector.broadcast %29 : f32 to vector<16xf32>
    %31 = arith.addf %27, %30 : vector<16xf32>
    %32 = vector.shape_cast %31 : vector<16xf32> to vector<1x16xf32>
    %c0_23 = arith.constant 0 : index
    %c0_24 = arith.constant 0 : index
    %33 = vector.load %arg10[%c0_23, %c0_24] : memref<1x16xf32, #tpu.memory_space<vmem>>, vector<1x16xf32>
    tpu.vector_store %arg10[%c0_23, %c0_24], %32 {strides = array<i32>} : memref<1x16xf32, #tpu.memory_space<vmem>>, vector<1x16xf32>,
    return
  }
  func.func @transform_0(%arg0: i32) -> (i32, i32) {
    %c0_i32 = arith.constant 0 : i32
    %c0_i32_0 = arith.constant 0 : i32
    return %arg0, %c0_i32 : i32, i32
  }
  func.func @transform_1(%arg0: i32) -> (i32, i32) {
    %c0_i32 = arith.constant 0 : i32
    %c0_i32_0 = arith.constant 0 : i32
    %c0_i32_1 = arith.constant 0 : i32
    return %c0_i32, %c0_i32_0 : i32, i32
  }
  func.func @transform_2(%arg0: i32) -> (i32, i32) {
    %c0_i32 = arith.constant 0 : i32
    %c0_i32_0 = arith.constant 0 : i32
    %c0_i32_1 = arith.constant 0 : i32
    return %c0_i32, %c0_i32_0 : i32, i32
  }
  func.func @transform_3(%arg0: i32) -> (i32, i32) {
    %c0_i32 = arith.constant 0 : i32
    %c0_i32_0 = arith.constant 0 : i32
    %c0_i32_1 = arith.constant 0 : i32
    return %c0_i32, %c0_i32_0 : i32, i32
  }
  func.func @transform_4(%arg0: i32) -> (i32, i32) {
    %c0_i32 = arith.constant 0 : i32
    %c0_i32_0 = arith.constant 0 : i32
    %c0_i32_1 = arith.constant 0 : i32
    return %c0_i32, %c0_i32_0 : i32, i32
  }
  func.func @transform_5(%arg0: i32) -> (i32, i32) {
    %c0_i32 = arith.constant 0 : i32
    %c0_i32_0 = arith.constant 0 : i32
    %c0_i32_1 = arith.constant 0 : i32
    return %c0_i32, %c0_i32_0 : i32, i32
  }
  func.func @transform_6(%arg0: i32) -> (i32, i32) {
    %c0_i32 = arith.constant 0 : i32
    %c0_i32_0 = arith.constant 0 : i32
    %c0_i32_1 = arith.constant 0 : i32
    return %c0_i32, %c0_i32_0 : i32, i32
  }
  func.func @transform_7(%arg0: i32) -> (i32, i32) {
    %c0_i32 = arith.constant 0 : i32
    %c0_i32_0 = arith.constant 0 : i32
    %c0_i32_1 = arith.constant 0 : i32
    return %c0_i32, %c0_i32_0 : i32, i32
  }
  func.func @transform_8(%arg0: i32) -> (i32, i32) {
    %c0_i32 = arith.constant 0 : i32
    %c0_i32_0 = arith.constant 0 : i32
    %c0_i32_1 = arith.constant 0 : i32
    return %c0_i32, %c0_i32_0 : i32, i32
  }
  func.func @transform_9(%arg0: i32) -> (i32, i32) {
    %c0_i32 = arith.constant 0 : i32
    %c0_i32_0 = arith.constant 0 : i32
    return %c0_i32, %arg0 : i32, i32
  }
}

</mosaic_0001>

<llo_original>
// kernel: nn229_forward.1
$region0: #{nn229_forward.1}
  #allocation0 [shape = 'u32[]', space=smem, size = 0x4, offset = 0x4, fixed_abs, tag = 'smem constant byte address 0x4 - core index']
  #allocation1 [shape = 'u32[144,128]{1,0:T(1,128)}', space=vmem, size = 0x12000, scoped, tag = 'internal scratch']
  #allocation2 [shape = 'f32[1,1]{1,0:T(1,128)S(1)}', space=vmem, size = 0x200, scoped, tag = 'scoped memory for nn229_forward.1']
  %s0 = inlined_call_operand.vmem [shape: bf16[16,384], index: 0, kind: input, shape index: {}]
  %s1 = inlined_call_operand.vmem [shape: bf16[384,128], index: 1, kind: input, shape index: {}]
  %s2 = inlined_call_operand.vmem [shape: f32[1,128], index: 2, kind: input, shape index: {}]
  %s3 = inlined_call_operand.vmem [shape: bf16[128,512], index: 3, kind: input, shape index: {}]
  %s4 = inlined_call_operand.vmem [shape: f32[1,512], index: 4, kind: input, shape index: {}]
  %s5 = inlined_call_operand.vmem [shape: bf16[512,64], index: 5, kind: input, shape index: {}]
  %s6 = inlined_call_operand.vmem [shape: f32[1,64], index: 6, kind: input, shape index: {}]
  %s7 = inlined_call_operand.vmem [shape: f32[1,64], index: 7, kind: input, shape index: {}]
  %s8 = inlined_call_operand.<no memory space> [shape: f32[1,1], index: 8, kind: input, shape index: {}]
  %s9 = inlined_call_operand.vmem [shape: f32[1,16], index: 9, kind: output, shape index: {}]
  %s10 = sld [smem:[#allocation0]]
  $region46: #{nn229_forward.1} parent=0
    _
  %s12 = ssub.s32 1, %s10
  %s13 = scalar_select 0, %s12, %s10
  %v14 = vstv %s8
  %15 = vst [vmem:[#allocation2] sm:$0x1] %v14
  // Predicated region
  $region2: #{nn229_forward.1} parent=0 // pred_check
    _
  $region3: #{nn229_forward.1} parent=0 // pred_check_branch
    %17 = sbr.rel (0) target = $region5
  $region4: #{nn229_forward.1} parent=0 // pred_region
    _
  $region5: #{nn229_forward.1} parent=0 // pred_fallthru
    _
  // Predicated region
  $region6: #{nn229_forward.1} parent=0 // pred_check
    _
  $region7: #{nn229_forward.1} parent=0 // pred_check_branch
    %19 = sbr.rel (0) target = $region9
  $region8: #{nn229_forward.1} parent=0 // pred_region
    _
  $region9: #{nn229_forward.1} parent=0 // pred_fallthru
    _
  // Predicated region
  $region10: #{nn229_forward.1} parent=0 // pred_check
    _
  $region11: #{nn229_forward.1} parent=0 // pred_check_branch
    %21 = sbr.rel (0) target = $region13
  $region12: #{nn229_forward.1} parent=0 // pred_region
    _
  $region13: #{nn229_forward.1} parent=0 // pred_fallthru
    _
  // Predicated region
  $region14: #{nn229_forward.1} parent=0 // pred_check
    _
  $region15: #{nn229_forward.1} parent=0 // pred_check_branch
    %23 = sbr.rel (0) target = $region17
  $region16: #{nn229_forward.1} parent=0 // pred_region
    _
  $region17: #{nn229_forward.1} parent=0 // pred_fallthru
    _
  // Predicated region
  $region18: #{nn229_forward.1} parent=0 // pred_check
    _
  $region19: #{nn229_forward.1} parent=0 // pred_check_branch
    %25 = sbr.rel (0) target = $region21
  $region20: #{nn229_forward.1} parent=0 // pred_region
    _
  $region21: #{nn229_forward.1} parent=0 // pred_fallthru
    _
  // Predicated region
  $region22: #{nn229_forward.1} parent=0 // pred_check
    _
  $region23: #{nn229_forward.1} parent=0 // pred_check_branch
    %27 = sbr.rel (0) target = $region25
  $region24: #{nn229_forward.1} parent=0 // pred_region
    _
  $region25: #{nn229_forward.1} parent=0 // pred_fallthru
    _
  // Predicated region
  $region26: #{nn229_forward.1} parent=0 // pred_check
    _
  $region27: #{nn229_forward.1} parent=0 // pred_check_branch
    %29 = sbr.rel (0) target = $region29
  $region28: #{nn229_forward.1} parent=0 // pred_region
    _
  $region29: #{nn229_forward.1} parent=0 // pred_fallthru
    _
  // Predicated region
  $region30: #{nn229_forward.1} parent=0 // pred_check
    _
  $region31: #{nn229_forward.1} parent=0 // pred_check_branch
    %31 = sbr.rel (0) target = $region33
  $region32: #{nn229_forward.1} parent=0 // pred_region
    _
  $region33: #{nn229_forward.1} parent=0 // pred_fallthru
    _
  // Predicated region
  $region34: #{nn229_forward.1} parent=0 // pred_check
    _
  $region35: #{nn229_forward.1} parent=0 // pred_check_branch
    %33 = sbr.rel (0) target = $region37
  $region36: #{nn229_forward.1} parent=0 // pred_region
    _
  $region37: #{nn229_forward.1} parent=0 // pred_fallthru
    _
  %v35 = vld [vmem:[%s0] sm:$0xff]
  %v36 = vld [vmem:[%s0 + $0x8] sm:$0xf]
  %v37 = vld [vmem:[%s0 + $0xc] sm:$0xff]
  %v38 = vld [vmem:[%s0 + $0x14] sm:$0xf]
  %v39 = vld [vmem:[%s1] sm:$0xf]
  %v40 = vld [vmem:[%s1 + $0x4] sm:$0xf]
  %v41 = vld [vmem:[%s1 + $0x8] sm:$0xf]
  %v42 = vld [vmem:[%s1 + $0xc] sm:$0xf]
  %v43 = vld [vmem:[%s1 + $0x10] sm:$0xf]
  %v44 = vld [vmem:[%s1 + $0x14] sm:$0xf]
  %v45 = vld [vmem:[%s1 + $0x18] sm:$0xf]
  %v46 = vld [vmem:[%s1 + $0x1c] sm:$0xf]
  %v47 = vld [vmem:[%s1 + $0x20] sm:$0xf]
  %v48 = vld [vmem:[%s1 + $0x24] sm:$0xf]
  %v49 = vld [vmem:[%s1 + $0x28] sm:$0xf]
  %v50 = vld [vmem:[%s1 + $0x2c] sm:$0xf]
  %v51 = vld [vmem:[%s1 + $0x30] sm:$0xf]
  %v52 = vld [vmem:[%s1 + $0x34] sm:$0xf]
  %v53 = vld [vmem:[%s1 + $0x38] sm:$0xf]
  %v54 = vld [vmem:[%s1 + $0x3c] sm:$0xf]
  %v55 = vld [vmem:[%s1 + $0x40] sm:$0xf]
  %v56 = vld [vmem:[%s1 + $0x44] sm:$0xf]
  %v57 = vld [vmem:[%s1 + $0x48] sm:$0xf]
  %v58 = vld [vmem:[%s1 + $0x4c] sm:$0xf]
  %v59 = vld [vmem:[%s1 + $0x50] sm:$0xf]
  %v60 = vld [vmem:[%s1 + $0x54] sm:$0xf]
  %v61 = vld [vmem:[%s1 + $0x58] sm:$0xf]
  %v62 = vld [vmem:[%s1 + $0x5c] sm:$0xf]
  %v63 = vld [vmem:[%s1 + $0x60] sm:$0xf]
  %v64 = vld [vmem:[%s1 + $0x64] sm:$0xf]
  %v65 = vld [vmem:[%s1 + $0x68] sm:$0xf]
  %v66 = vld [vmem:[%s1 + $0x6c] sm:$0xf]
  %v67 = vld [vmem:[%s1 + $0x70] sm:$0xf]
  %v68 = vld [vmem:[%s1 + $0x74] sm:$0xf]
  %v69 = vld [vmem:[%s1 + $0x78] sm:$0xf]
  %v70 = vld [vmem:[%s1 + $0x7c] sm:$0xf]
  %v71 = vld [vmem:[%s1 + $0x80] sm:$0xf]
  %v72 = vld [vmem:[%s1 + $0x84] sm:$0xf]
  %v73 = vld [vmem:[%s1 + $0x88] sm:$0xf]
  %v74 = vld [vmem:[%s1 + $0x8c] sm:$0xf]
  %v75 = vld [vmem:[%s1 + $0x90] sm:$0xf]
  %v76 = vld [vmem:[%s1 + $0x94] sm:$0xf]
  %v77 = vld [vmem:[%s1 + $0x98] sm:$0xf]
  %v78 = vld [vmem:[%s1 + $0x9c] sm:$0xf]
  %v79 = vld [vmem:[%s1 + $0xa0] sm:$0xf]
  %v80 = vld [vmem:[%s1 + $0xa4] sm:$0xf]
  %v81 = vld [vmem:[%s1 + $0xa8] sm:$0xf]
  %v82 = vld [vmem:[%s1 + $0xac] sm:$0xf]
  %v83 = vld [vmem:[%s1 + $0xb0] sm:$0xf]
  %v84 = vld [vmem:[%s1 + $0xb4] sm:$0xf]
  %v85 = vld [vmem:[%s1 + $0xb8] sm:$0xf]
  %v86 = vld [vmem:[%s1 + $0xbc] sm:$0xf]
  %v87 = vld [vmem:[%s2] sm:$0x1]
  %v89 = vlaneseq
  %v90 = vshrl.u32 %v89, 7
  %v91 = vsub.s32 0, %v90
  %v92 = vrot.slane %v87, %v91
  %v98 = vunpack.c.l.b16 %v35
  %v99 = vunpack.c.h.b16 %v35
  %v100 = vunpack.c.l.b16 %v36
  %v101 = vunpack.c.l.b16 %v37
  %v102 = vunpack.c.h.b16 %v37
  %v103 = vunpack.c.l.b16 %v38
  %v104 = vpack.c.b16 %v101, %v98
  %v105 = vpack.c.b16 %v102, %v99
  %v106 = vpack.c.b16 %v103, %v100
  %v158 = vunpack.c.l.b16 %v39
  %v159 = vunpack.c.l.b16 %v40
  %v160 = vunpack.c.l.b16 %v41
  %v161 = vunpack.c.l.b16 %v42
  %v162 = vunpack.c.l.b16 %v43
  %v163 = vunpack.c.l.b16 %v44
  %v164 = vunpack.c.l.b16 %v45
  %v165 = vunpack.c.l.b16 %v46
  %v166 = vunpack.c.l.b16 %v47
  %v167 = vunpack.c.l.b16 %v48
  %v168 = vunpack.c.l.b16 %v49
  %v169 = vunpack.c.l.b16 %v50
  %v170 = vunpack.c.l.b16 %v51
  %v171 = vunpack.c.l.b16 %v52
  %v172 = vunpack.c.l.b16 %v53
  %v173 = vunpack.c.l.b16 %v54
  %v174 = vunpack.c.l.b16 %v55
  %v175 = vunpack.c.l.b16 %v56
  %v176 = vunpack.c.l.b16 %v57
  %v177 = vunpack.c.l.b16 %v58
  %v178 = vunpack.c.l.b16 %v59
  %v179 = vunpack.c.l.b16 %v60
  %v180 = vunpack.c.l.b16 %v61
  %v181 = vunpack.c.l.b16 %v62
  %v182 = vunpack.c.l.b16 %v63
  %v183 = vunpack.c.l.b16 %v64
  %v184 = vunpack.c.l.b16 %v65
  %v185 = vunpack.c.l.b16 %v66
  %v186 = vunpack.c.l.b16 %v67
  %v187 = vunpack.c.l.b16 %v68
  %v188 = vunpack.c.l.b16 %v69
  %v189 = vunpack.c.l.b16 %v70
  %v190 = vunpack.c.l.b16 %v71
  %v191 = vunpack.c.l.b16 %v72
  %v192 = vunpack.c.l.b16 %v73
  %v193 = vunpack.c.l.b16 %v74
  %v194 = vunpack.c.l.b16 %v75
  %v195 = vunpack.c.l.b16 %v76
  %v196 = vunpack.c.l.b16 %v77
  %v197 = vunpack.c.l.b16 %v78
  %v198 = vunpack.c.l.b16 %v79
  %v199 = vunpack.c.l.b16 %v80
  %v200 = vunpack.c.l.b16 %v81
  %v201 = vunpack.c.l.b16 %v82
  %v202 = vunpack.c.l.b16 %v83
  %v203 = vunpack.c.l.b16 %v84
  %v204 = vunpack.c.l.b16 %v85
  %v205 = vunpack.c.l.b16 %v86
  %v206 = vpack.c.b16 %v159, %v158
  %v207 = vpack.c.b16 %v161, %v160
  %v208 = vpack.c.b16 %v163, %v162
  %v209 = vpack.c.b16 %v165, %v164
  %v210 = vpack.c.b16 %v167, %v166
  %v211 = vpack.c.b16 %v169, %v168
  %v212 = vpack.c.b16 %v171, %v170
  %v213 = vpack.c.b16 %v173, %v172
  %v214 = vpack.c.b16 %v175, %v174
  %v215 = vpack.c.b16 %v177, %v176
  %v216 = vpack.c.b16 %v179, %v178
  %v217 = vpack.c.b16 %v181, %v180
  %v218 = vpack.c.b16 %v183, %v182
  %v219 = vpack.c.b16 %v185, %v184
  %v220 = vpack.c.b16 %v187, %v186
  %v221 = vpack.c.b16 %v189, %v188
  %v222 = vpack.c.b16 %v191, %v190
  %v223 = vpack.c.b16 %v193, %v192
  %v224 = vpack.c.b16 %v195, %v194
  %v225 = vpack.c.b16 %v197, %v196
  %v226 = vpack.c.b16 %v199, %v198
  %v227 = vpack.c.b16 %v201, %v200
  %v228 = vpack.c.b16 %v203, %v202
  %v229 = vpack.c.b16 %v205, %v204
  %254 = vmatprep.subr.bf16.mxu0 0
  %255 = vmatpush1.bf16.msra.mxu0 %v206
  %256 = vmatprep.subr.bf16.mxu0 0
  %257 = vmatpush1.bf16.msra.mxu0 %v207
  %258 = vmatprep.subr.bf16.mxu0 0
  %259 = vmatpush1.bf16.msra.mxu0 %v208
  %260 = vmatprep.subr.bf16.mxu0 0
  %261 = vmatpush1.bf16.msra.mxu0 %v209
  %262 = vmatprep.subr.bf16.mxu0 0
  %263 = vmatpush1.bf16.msra.mxu0 %v210
  %264 = vmatprep.subr.bf16.mxu0 0
  %265 = vmatpush1.bf16.msra.mxu0 %v211
  %266 = vmatprep.subr.bf16.mxu0 0
  %267 = vmatpush1.bf16.msra.mxu0 %v212
  %268 = vmatprep.subr.bf16.mxu0 0
  %269 = vmatpush1.bf16.msra.mxu0 %v213
  %270 = vmatprep.subr.bf16.mxu0 0
  %271 = vmatpush1.bf16.msra.mxu0 %v214
  %272 = vmatprep.subr.bf16.mxu0 0
  %273 = vmatpush1.bf16.msra.mxu0 %v215
  %274 = vmatprep.subr.bf16.mxu0 0
  %275 = vmatpush1.bf16.msra.mxu0 %v216
  %276 = vmatprep.subr.bf16.mxu0 0
  %277 = vmatpush1.bf16.msra.mxu0 %v217
  %278 = vmatprep.subr.bf16.mxu0 0
  %279 = vmatpush1.bf16.msra.mxu0 %v218
  %280 = vmatprep.subr.bf16.mxu0 0
  %281 = vmatpush1.bf16.msra.mxu0 %v219
  %282 = vmatprep.subr.bf16.mxu0 0
  %283 = vmatpush1.bf16.msra.mxu0 %v220
  %284 = vmatprep.subr.bf16.mxu0 0
  %285 = vmatpush1.bf16.msra.mxu0 %v221
  %286 = vmatprep.mubr.bf16.mxu0 %v105
  %287 = vmatmul.mubr.bf16.gmra.mrb[0].mxu0 %v104
  %v288 = vpop.f32.mrb[0].mxu0
  %v289 = vadd.f32 %v92, %v288
  %v290 = vpop.f32.mrb[0].mxu0
  %v291 = vpop.f32.mrb[0].mxu0
  %v292 = vadd.f32 %v92, %v291
  %v293 = vpop.f32.mrb[0].mxu0
  %294 = vdwg.mxu0
  %295 = vmatprep.subr.bf16.mxu0 0
  %296 = vmatpush1.bf16.msra.mxu0 %v222
  %297 = vmatprep.subr.bf16.mxu0 0
  %298 = vmatpush1.bf16.msra.mxu0 %v223
  %299 = vmatprep.subr.bf16.mxu0 0
  %300 = vmatpush1.bf16.msra.mxu0 %v224
  %301 = vmatprep.subr.bf16.mxu0 0
  %302 = vmatpush1.bf16.msra.mxu0 %v225
  %303 = vmatprep.subr.bf16.mxu0 0
  %304 = vmatpush1.bf16.msra.mxu0 %v226
  %305 = vmatprep.subr.bf16.mxu0 0
  %306 = vmatpush1.bf16.msra.mxu0 %v227
  %307 = vmatprep.subr.bf16.mxu0 0
  %308 = vmatpush1.bf16.msra.mxu0 %v228
  %309 = vmatprep.subr.bf16.mxu0 0
  %310 = vmatpush1.bf16.msra.mxu0 %v229
  %311 = vmatprep.subr.bf16.mxu0 0
  %312 = vmatpush1.bf16.msra.mxu0 0
  %313 = vmatprep.subr.bf16.mxu0 0
  %314 = vmatpush1.bf16.msra.mxu0 0
  %315 = vmatprep.subr.bf16.mxu0 0
  %316 = vmatpush1.bf16.msra.mxu0 0
  %317 = vmatprep.subr.bf16.mxu0 0
  %318 = vmatpush1.bf16.msra.mxu0 0
  %319 = vmatprep.subr.bf16.mxu0 0
  %320 = vmatpush1.bf16.msra.mxu0 0
  %321 = vmatprep.subr.bf16.mxu0 0
  %322 = vmatpush1.bf16.msra.mxu0 0
  %323 = vmatprep.subr.bf16.mxu0 0
  %324 = vmatpush1.bf16.msra.mxu0 0
  %325 = vmatprep.subr.bf16.mxu0 0
  %326 = vmatpush1.bf16.msra.mxu0 0
  %327 = vmatprep.mubr.bf16.mxu0 0
  %328 = vmatmul.mubr.bf16.gmra.mrb[0].mxu0 %v106
  %v329 = vpop.f32.mrb[0].mxu0
  %v330 = vadd.f32 %v289, %v329
  %v331 = vpop.f32.mrb[0].mxu0
  %v332 = vpop.f32.mrb[0].mxu0
  %v333 = vadd.f32 %v292, %v332
  %v334 = vpop.f32.mrb[0].mxu0
  %335 = vdwg.mxu0
  %v336 = vmax.f32 %v330, 0.0
  %v337 = vmax.f32 %v333, 0.0
  %v338 = vpack.c.bf16 %v337, %v336
  %v339 = vld [vmem:[%s3] sm:$0xff]
  %v340 = vld [vmem:[%s3 + $0x8] sm:$0xff]
  %v341 = vld [vmem:[%s3 + $0x10] sm:$0xff]
  %v342 = vld [vmem:[%s3 + $0x18] sm:$0xff]
  %v343 = vld [vmem:[%s3 + $0x20] sm:$0xff]
  %v344 = vld [vmem:[%s3 + $0x28] sm:$0xff]
  %v345 = vld [vmem:[%s3 + $0x30] sm:$0xff]
  %v346 = vld [vmem:[%s3 + $0x38] sm:$0xff]
  %v347 = vld [vmem:[%s3 + $0x40] sm:$0xff]
  %v348 = vld [vmem:[%s3 + $0x48] sm:$0xff]
  %v349 = vld [vmem:[%s3 + $0x50] sm:$0xff]
  %v350 = vld [vmem:[%s3 + $0x58] sm:$0xff]
  %v351 = vld [vmem:[%s3 + $0x60] sm:$0xff]
  %v352 = vld [vmem:[%s3 + $0x68] sm:$0xff]
  %v353 = vld [vmem:[%s3 + $0x70] sm:$0xff]
  %v354 = vld [vmem:[%s3 + $0x78] sm:$0xff]
  %v355 = vld [vmem:[%s3 + $0x80] sm:$0xff]
  %v356 = vld [vmem:[%s3 + $0x88] sm:$0xff]
  %v357 = vld [vmem:[%s3 + $0x90] sm:$0xff]
  %v358 = vld [vmem:[%s3 + $0x98] sm:$0xff]
  %v359 = vld [vmem:[%s3 + $0xa0] sm:$0xff]
  %v360 = vld [vmem:[%s3 + $0xa8] sm:$0xff]
  %v361 = vld [vmem:[%s3 + $0xb0] sm:$0xff]
  %v362 = vld [vmem:[%s3 + $0xb8] sm:$0xff]
  %v363 = vld [vmem:[%s3 + $0xc0] sm:$0xff]
  %v364 = vld [vmem:[%s3 + $0xc8] sm:$0xff]
  %v365 = vld [vmem:[%s3 + $0xd0] sm:$0xff]
  %v366 = vld [vmem:[%s3 + $0xd8] sm:$0xff]
  %v367 = vld [vmem:[%s3 + $0xe0] sm:$0xff]
  %v368 = vld [vmem:[%s3 + $0xe8] sm:$0xff]
  %v369 = vld [vmem:[%s3 + $0xf0] sm:$0xff]
  %v370 = vld [vmem:[%s3 + $0xf8] sm:$0xff]
  %v371 = vld [vmem:[%s4] sm:$0xf]
  %v373 = vlaneseq
  %v374 = vshrl.u32 %v373, 7
  %v375 = vsub.s32 0, %v374
  %v376 = vrot.slane %v371, %v375
  %v377 = vlaneseq
  %v378 = vshrl.u32 %v377, 7
  %v379 = vsub.s32 1, %v378
  %v380 = vrot.slane %v371, %v379
  %v381 = vlaneseq
  %v382 = vshrl.u32 %v381, 7
  %v383 = vsub.s32 2, %v382
  %v384 = vrot.slane %v371, %v383
  %v385 = vlaneseq
  %v386 = vshrl.u32 %v385, 7
  %v387 = vsub.s32 3, %v386
  %v388 = vrot.slane %v371, %v387
  %v425 = vunpack.c.l.b16 %v339
  %v426 = vunpack.c.h.b16 %v339
  %v427 = vunpack.c.l.b16 %v340
  %v428 = vunpack.c.h.b16 %v340
  %v429 = vunpack.c.l.b16 %v341
  %v430 = vunpack.c.h.b16 %v341
  %v431 = vunpack.c.l.b16 %v342
  %v432 = vunpack.c.h.b16 %v342
  %v433 = vunpack.c.l.b16 %v343
  %v434 = vunpack.c.h.b16 %v343
  %v435 = vunpack.c.l.b16 %v344
  %v436 = vunpack.c.h.b16 %v344
  %v437 = vunpack.c.l.b16 %v345
  %v438 = vunpack.c.h.b16 %v345
  %v439 = vunpack.c.l.b16 %v346
  %v440 = vunpack.c.h.b16 %v346
  %v441 = vunpack.c.l.b16 %v347
  %v442 = vunpack.c.h.b16 %v347
  %v443 = vunpack.c.l.b16 %v348
  %v444 = vunpack.c.h.b16 %v348
  %v445 = vunpack.c.l.b16 %v349
  %v446 = vunpack.c.h.b16 %v349
  %v447 = vunpack.c.l.b16 %v350
  %v448 = vunpack.c.h.b16 %v350
  %v449 = vunpack.c.l.b16 %v351
  %v450 = vunpack.c.h.b16 %v351
  %v451 = vunpack.c.l.b16 %v352
  %v452 = vunpack.c.h.b16 %v352
  %v453 = vunpack.c.l.b16 %v353
  %v454 = vunpack.c.h.b16 %v353
  %v455 = vunpack.c.l.b16 %v354
  %v456 = vunpack.c.h.b16 %v354
  %v457 = vunpack.c.l.b16 %v355
  %v458 = vunpack.c.h.b16 %v355
  %v459 = vunpack.c.l.b16 %v356
  %v460 = vunpack.c.h.b16 %v356
  %v461 = vunpack.c.l.b16 %v357
  %v462 = vunpack.c.h.b16 %v357
  %v463 = vunpack.c.l.b16 %v358
  %v464 = vunpack.c.h.b16 %v358
  %v465 = vunpack.c.l.b16 %v359
  %v466 = vunpack.c.h.b16 %v359
  %v467 = vunpack.c.l.b16 %v360
  %v468 = vunpack.c.h.b16 %v360
  %v469 = vunpack.c.l.b16 %v361
  %v470 = vunpack.c.h.b16 %v361
  %v471 = vunpack.c.l.b16 %v362
  %v472 = vunpack.c.h.b16 %v362
  %v473 = vunpack.c.l.b16 %v363
  %v474 = vunpack.c.h.b16 %v363
  %v475 = vunpack.c.l.b16 %v364
  %v476 = vunpack.c.h.b16 %v364
  %v477 = vunpack.c.l.b16 %v365
  %v478 = vunpack.c.h.b16 %v365
  %v479 = vunpack.c.l.b16 %v366
  %v480 = vunpack.c.h.b16 %v366
  %v481 = vunpack.c.l.b16 %v367
  %v482 = vunpack.c.h.b16 %v367
  %v483 = vunpack.c.l.b16 %v368
  %v484 = vunpack.c.h.b16 %v368
  %v485 = vunpack.c.l.b16 %v369
  %v486 = vunpack.c.h.b16 %v369
  %v487 = vunpack.c.l.b16 %v370
  %v488 = vunpack.c.h.b16 %v370
  %v489 = vpack.c.b16 %v429, %v425
  %v490 = vpack.c.b16 %v430, %v426
  %v491 = vpack.c.b16 %v431, %v427
  %v492 = vpack.c.b16 %v432, %v428
  %v493 = vpack.c.b16 %v437, %v433
  %v494 = vpack.c.b16 %v438, %v434
  %v495 = vpack.c.b16 %v439, %v435
  %v496 = vpack.c.b16 %v440, %v436
  %v497 = vpack.c.b16 %v445, %v441
  %v498 = vpack.c.b16 %v446, %v442
  %v499 = vpack.c.b16 %v447, %v443
  %v500 = vpack.c.b16 %v448, %v444
  %v501 = vpack.c.b16 %v453, %v449
  %v502 = vpack.c.b16 %v454, %v450
  %v503 = vpack.c.b16 %v455, %v451
  %v504 = vpack.c.b16 %v456, %v452
  %v505 = vpack.c.b16 %v461, %v457
  %v506 = vpack.c.b16 %v462, %v458
  %v507 = vpack.c.b16 %v463, %v459
  %v508 = vpack.c.b16 %v464, %v460
  %v509 = vpack.c.b16 %v469, %v465
  %v510 = vpack.c.b16 %v470, %v466
  %v511 = vpack.c.b16 %v471, %v467
  %v512 = vpack.c.b16 %v472, %v468
  %v513 = vpack.c.b16 %v477, %v473
  %v514 = vpack.c.b16 %v478, %v474
  %v515 = vpack.c.b16 %v479, %v475
  %v516 = vpack.c.b16 %v480, %v476
  %v517 = vpack.c.b16 %v485, %v481
  %v518 = vpack.c.b16 %v486, %v482
  %v519 = vpack.c.b16 %v487, %v483
  %v520 = vpack.c.b16 %v488, %v484
  %553 = vmatprep.subr.bf16.mxu0 %v490
  %554 = vmatpush1.bf16.msra.mxu0 %v489
  %555 = vmatprep.subr.bf16.mxu0 %v494
  %556 = vmatpush1.bf16.msra.mxu0 %v493
  %557 = vmatprep.subr.bf16.mxu0 %v498
  %558 = vmatpush1.bf16.msra.mxu0 %v497
  %559 = vmatprep.subr.bf16.mxu0 %v502
  %560 = vmatpush1.bf16.msra.mxu0 %v501
  %561 = vmatprep.subr.bf16.mxu0 %v506
  %562 = vmatpush1.bf16.msra.mxu0 %v505
  %563 = vmatprep.subr.bf16.mxu0 %v510
  %564 = vmatpush1.bf16.msra.mxu0 %v509
  %565 = vmatprep.subr.bf16.mxu0 %v514
  %566 = vmatpush1.bf16.msra.mxu0 %v513
  %567 = vmatprep.subr.bf16.mxu0 %v518
  %568 = vmatpush1.bf16.msra.mxu0 %v517
  %569 = vmatprep.subr.bf16.mxu0 0
  %570 = vmatpush1.bf16.msra.mxu0 0
  %571 = vmatprep.subr.bf16.mxu0 0
  %572 = vmatpush1.bf16.msra.mxu0 0
  %573 = vmatprep.subr.bf16.mxu0 0
  %574 = vmatpush1.bf16.msra.mxu0 0
  %575 = vmatprep.subr.bf16.mxu0 0
  %576 = vmatpush1.bf16.msra.mxu0 0
  %577 = vmatprep.subr.bf16.mxu0 0
  %578 = vmatpush1.bf16.msra.mxu0 0
  %579 = vmatprep.subr.bf16.mxu0 0
  %580 = vmatpush1.bf16.msra.mxu0 0
  %581 = vmatprep.subr.bf16.mxu0 0
  %582 = vmatpush1.bf16.msra.mxu0 0
  %583 = vmatprep.subr.bf16.mxu0 0
  %584 = vmatpush1.bf16.msra.mxu0 0
  %585 = vmatprep.mubr.bf16.mxu0 0
  %586 = vmatmul.mubr.bf16.gmra.mrb[0].mxu0 %v338
  %v587 = vpop.f32.mrb[0].mxu0
  %v588 = vadd.f32 %v376, %v587
  %v589 = vpop.f32.mrb[0].mxu0
  %v590 = vadd.f32 %v380, %v589
  %v591 = vpop.f32.mrb[0].mxu0
  %v592 = vadd.f32 %v376, %v591
  %v593 = vpop.f32.mrb[0].mxu0
  %v594 = vadd.f32 %v380, %v593
  %595 = vdwg.mxu0
  %596 = vmatprep.subr.bf16.mxu0 %v492
  %597 = vmatpush1.bf16.msra.mxu0 %v491
  %598 = vmatprep.subr.bf16.mxu0 %v496
  %599 = vmatpush1.bf16.msra.mxu0 %v495
  %600 = vmatprep.subr.bf16.mxu0 %v500
  %601 = vmatpush1.bf16.msra.mxu0 %v499
  %602 = vmatprep.subr.bf16.mxu0 %v504
  %603 = vmatpush1.bf16.msra.mxu0 %v503
  %604 = vmatprep.subr.bf16.mxu0 %v508
  %605 = vmatpush1.bf16.msra.mxu0 %v507
  %606 = vmatprep.subr.bf16.mxu0 %v512
  %607 = vmatpush1.bf16.msra.mxu0 %v511
  %608 = vmatprep.subr.bf16.mxu0 %v516
  %609 = vmatpush1.bf16.msra.mxu0 %v515
  %610 = vmatprep.subr.bf16.mxu0 %v520
  %611 = vmatpush1.bf16.msra.mxu0 %v519
  %612 = vmatprep.subr.bf16.mxu0 0
  %613 = vmatpush1.bf16.msra.mxu0 0
  %614 = vmatprep.subr.bf16.mxu0 0
  %615 = vmatpush1.bf16.msra.mxu0 0
  %616 = vmatprep.subr.bf16.mxu0 0
  %617 = vmatpush1.bf16.msra.mxu0 0
  %618 = vmatprep.subr.bf16.mxu0 0
  %619 = vmatpush1.bf16.msra.mxu0 0
  %620 = vmatprep.subr.bf16.mxu0 0
  %621 = vmatpush1.bf16.msra.mxu0 0
  %622 = vmatprep.subr.bf16.mxu0 0
  %623 = vmatpush1.bf16.msra.mxu0 0
  %624 = vmatprep.subr.bf16.mxu0 0
  %625 = vmatpush1.bf16.msra.mxu0 0
  %626 = vmatprep.subr.bf16.mxu0 0
  %627 = vmatpush1.bf16.msra.mxu0 0
  %628 = vmatprep.mubr.bf16.mxu0 0
  %629 = vmatmul.mubr.bf16.gmra.mrb[0].mxu0 %v338
  %v630 = vpop.f32.mrb[0].mxu0
  %v631 = vadd.f32 %v384, %v630
  %v632 = vpop.f32.mrb[0].mxu0
  %v633 = vadd.f32 %v388, %v632
  %v634 = vpop.f32.mrb[0].mxu0
  %v635 = vadd.f32 %v384, %v634
  %v636 = vpop.f32.mrb[0].mxu0
  %v637 = vadd.f32 %v388, %v636
  %638 = vdwg.mxu0
  %v639 = vmax.f32 %v588, 0.0
  %v640 = vmax.f32 %v590, 0.0
  %v641 = vmax.f32 %v631, 0.0
  %v642 = vmax.f32 %v633, 0.0
  %v643 = vmax.f32 %v592, 0.0
  %v644 = vmax.f32 %v594, 0.0
  %v645 = vmax.f32 %v635, 0.0
  %v646 = vmax.f32 %v637, 0.0
  %v647 = vpack.c.bf16 %v643, %v639
  %v648 = vpack.c.bf16 %v644, %v640
  %v649 = vpack.c.bf16 %v645, %v641
  %v650 = vpack.c.bf16 %v646, %v642
  %v651 = vld [vmem:[%s5] sm:$0xf]
  %v652 = vld [vmem:[%s5 + $0x4] sm:$0xf]
  %v653 = vld [vmem:[%s5 + $0x8] sm:$0xf]
  %v654 = vld [vmem:[%s5 + $0xc] sm:$0xf]
  %v655 = vld [vmem:[%s5 + $0x10] sm:$0xf]
  %v656 = vld [vmem:[%s5 + $0x14] sm:$0xf]
  %v657 = vld [vmem:[%s5 + $0x18] sm:$0xf]
  %v658 = vld [vmem:[%s5 + $0x1c] sm:$0xf]
  %v659 = vld [vmem:[%s5 + $0x20] sm:$0xf]
  %v660 = vld [vmem:[%s5 + $0x24] sm:$0xf]
  %v661 = vld [vmem:[%s5 + $0x28] sm:$0xf]
  %v662 = vld [vmem:[%s5 + $0x2c] sm:$0xf]
  %v663 = vld [vmem:[%s5 + $0x30] sm:$0xf]
  %v664 = vld [vmem:[%s5 + $0x34] sm:$0xf]
  %v665 = vld [vmem:[%s5 + $0x38] sm:$0xf]
  %v666 = vld [vmem:[%s5 + $0x3c] sm:$0xf]
  %v667 = vld [vmem:[%s5 + $0x40] sm:$0xf]
  %v668 = vld [vmem:[%s5 + $0x44] sm:$0xf]
  %v669 = vld [vmem:[%s5 + $0x48] sm:$0xf]
  %v670 = vld [vmem:[%s5 + $0x4c] sm:$0xf]
  %v671 = vld [vmem:[%s5 + $0x50] sm:$0xf]
  %v672 = vld [vmem:[%s5 + $0x54] sm:$0xf]
  %v673 = vld [vmem:[%s5 + $0x58] sm:$0xf]
  %v674 = vld [vmem:[%s5 + $0x5c] sm:$0xf]
  %v675 = vld [vmem:[%s5 + $0x60] sm:$0xf]
  %v676 = vld [vmem:[%s5 + $0x64] sm:$0xf]
  %v677 = vld [vmem:[%s5 + $0x68] sm:$0xf]
  %v678 = vld [vmem:[%s5 + $0x6c] sm:$0xf]
  %v679 = vld [vmem:[%s5 + $0x70] sm:$0xf]
  %v680 = vld [vmem:[%s5 + $0x74] sm:$0xf]
  %v681 = vld [vmem:[%s5 + $0x78] sm:$0xf]
  %v682 = vld [vmem:[%s5 + $0x7c] sm:$0xf]
  %v683 = vld [vmem:[%s5 + $0x80] sm:$0xf]
  %v684 = vld [vmem:[%s5 + $0x84] sm:$0xf]
  %v685 = vld [vmem:[%s5 + $0x88] sm:$0xf]
  %v686 = vld [vmem:[%s5 + $0x8c] sm:$0xf]
  %v687 = vld [vmem:[%s5 + $0x90] sm:$0xf]
  %v688 = vld [vmem:[%s5 + $0x94] sm:$0xf]
  %v689 = vld [vmem:[%s5 + $0x98] sm:$0xf]
  %v690 = vld [vmem:[%s5 + $0x9c] sm:$0xf]
  %v691 = vld [vmem:[%s5 + $0xa0] sm:$0xf]
  %v692 = vld [vmem:[%s5 + $0xa4] sm:$0xf]
  %v693 = vld [vmem:[%s5 + $0xa8] sm:$0xf]
  %v694 = vld [vmem:[%s5 + $0xac] sm:$0xf]
  %v695 = vld [vmem:[%s5 + $0xb0] sm:$0xf]
  %v696 = vld [vmem:[%s5 + $0xb4] sm:$0xf]
  %v697 = vld [vmem:[%s5 + $0xb8] sm:$0xf]
  %v698 = vld [vmem:[%s5 + $0xbc] sm:$0xf]
  %v699 = vld [vmem:[%s5 + $0xc0] sm:$0xf]
  %v700 = vld [vmem:[%s5 + $0xc4] sm:$0xf]
  %v701 = vld [vmem:[%s5 + $0xc8] sm:$0xf]
  %v702 = vld [vmem:[%s5 + $0xcc] sm:$0xf]
  %v703 = vld [vmem:[%s5 + $0xd0] sm:$0xf]
  %v704 = vld [vmem:[%s5 + $0xd4] sm:$0xf]
  %v705 = vld [vmem:[%s5 + $0xd8] sm:$0xf]
  %v706 = vld [vmem:[%s5 + $0xdc] sm:$0xf]
  %v707 = vld [vmem:[%s5 + $0xe0] sm:$0xf]
  %v708 = vld [vmem:[%s5 + $0xe4] sm:$0xf]
  %v709 = vld [vmem:[%s5 + $0xe8] sm:$0xf]
  %v710 = vld [vmem:[%s5 + $0xec] sm:$0xf]
  %v711 = vld [vmem:[%s5 + $0xf0] sm:$0xf]
  %v712 = vld [vmem:[%s5 + $0xf4] sm:$0xf]
  %v713 = vld [vmem:[%s5 + $0xf8] sm:$0xf]
  %v714 = vld [vmem:[%s5 + $0xfc] sm:$0xf]
  %v715 = vld [vmem:[%s6] sm:$0x1]
  %v717 = vlaneseq
  %v718 = vshrl.u32 %v717, 7
  %v719 = vsub.s32 0, %v718
  %v720 = vrot.slane %v715, %v719
  %v786 = vunpack.c.l.b16 %v651
  %v787 = vunpack.c.l.b16 %v652
  %v788 = vunpack.c.l.b16 %v653
  %v789 = vunpack.c.l.b16 %v654
  %v790 = vunpack.c.l.b16 %v655
  %v791 = vunpack.c.l.b16 %v656
  %v792 = vunpack.c.l.b16 %v657
  %v793 = vunpack.c.l.b16 %v658
  %v794 = vunpack.c.l.b16 %v659
  %v795 = vunpack.c.l.b16 %v660
  %v796 = vunpack.c.l.b16 %v661
  %v797 = vunpack.c.l.b16 %v662
  %v798 = vunpack.c.l.b16 %v663
  %v799 = vunpack.c.l.b16 %v664
  %v800 = vunpack.c.l.b16 %v665
  %v801 = vunpack.c.l.b16 %v666
  %v802 = vunpack.c.l.b16 %v667
  %v803 = vunpack.c.l.b16 %v668
  %v804 = vunpack.c.l.b16 %v669
  %v805 = vunpack.c.l.b16 %v670
  %v806 = vunpack.c.l.b16 %v671
  %v807 = vunpack.c.l.b16 %v672
  %v808 = vunpack.c.l.b16 %v673
  %v809 = vunpack.c.l.b16 %v674
  %v810 = vunpack.c.l.b16 %v675
  %v811 = vunpack.c.l.b16 %v676
  %v812 = vunpack.c.l.b16 %v677
  %v813 = vunpack.c.l.b16 %v678
  %v814 = vunpack.c.l.b16 %v679
  %v815 = vunpack.c.l.b16 %v680
  %v816 = vunpack.c.l.b16 %v681
  %v817 = vunpack.c.l.b16 %v682
  %v818 = vunpack.c.l.b16 %v683
  %v819 = vunpack.c.l.b16 %v684
  %v820 = vunpack.c.l.b16 %v685
  %v821 = vunpack.c.l.b16 %v686
  %v822 = vunpack.c.l.b16 %v687
  %v823 = vunpack.c.l.b16 %v688
  %v824 = vunpack.c.l.b16 %v689
  %v825 = vunpack.c.l.b16 %v690
  %v826 = vunpack.c.l.b16 %v691
  %v827 = vunpack.c.l.b16 %v692
  %v828 = vunpack.c.l.b16 %v693
  %v829 = vunpack.c.l.b16 %v694
  %v830 = vunpack.c.l.b16 %v695
  %v831 = vunpack.c.l.b16 %v696
  %v832 = vunpack.c.l.b16 %v697
  %v833 = vunpack.c.l.b16 %v698
  %v834 = vunpack.c.l.b16 %v699
  %v835 = vunpack.c.l.b16 %v700
  %v836 = vunpack.c.l.b16 %v701
  %v837 = vunpack.c.l.b16 %v702
  %v838 = vunpack.c.l.b16 %v703
  %v839 = vunpack.c.l.b16 %v704
  %v840 = vunpack.c.l.b16 %v705
  %v841 = vunpack.c.l.b16 %v706
  %v842 = vunpack.c.l.b16 %v707
  %v843 = vunpack.c.l.b16 %v708
  %v844 = vunpack.c.l.b16 %v709
  %v845 = vunpack.c.l.b16 %v710
  %v846 = vunpack.c.l.b16 %v711
  %v847 = vunpack.c.l.b16 %v712
  %v848 = vunpack.c.l.b16 %v713
  %v849 = vunpack.c.l.b16 %v714
  %v850 = vpack.c.b16 %v787, %v786
  %v851 = vpack.c.b16 %v789, %v788
  %v852 = vpack.c.b16 %v791, %v790
  %v853 = vpack.c.b16 %v793, %v792
  %v854 = vpack.c.b16 %v795, %v794
  %v855 = vpack.c.b16 %v797, %v796
  %v856 = vpack.c.b16 %v799, %v798
  %v857 = vpack.c.b16 %v801, %v800
  %v858 = vpack.c.b16 %v803, %v802
  %v859 = vpack.c.b16 %v805, %v804
  %v860 = vpack.c.b16 %v807, %v806
  %v861 = vpack.c.b16 %v809, %v808
  %v862 = vpack.c.b16 %v811, %v810
  %v863 = vpack.c.b16 %v813, %v812
  %v864 = vpack.c.b16 %v815, %v814
  %v865 = vpack.c.b16 %v817, %v816
  %v866 = vpack.c.b16 %v819, %v818
  %v867 = vpack.c.b16 %v821, %v820
  %v868 = vpack.c.b16 %v823, %v822
  %v869 = vpack.c.b16 %v825, %v824
  %v870 = vpack.c.b16 %v827, %v826
  %v871 = vpack.c.b16 %v829, %v828
  %v872 = vpack.c.b16 %v831, %v830
  %v873 = vpack.c.b16 %v833, %v832
  %v874 = vpack.c.b16 %v835, %v834
  %v875 = vpack.c.b16 %v837, %v836
  %v876 = vpack.c.b16 %v839, %v838
  %v877 = vpack.c.b16 %v841, %v840
  %v878 = vpack.c.b16 %v843, %v842
  %v879 = vpack.c.b16 %v845, %v844
  %v880 = vpack.c.b16 %v847, %v846
  %v881 = vpack.c.b16 %v849, %v848
  %914 = vmatprep.subr.bf16.mxu0 0
  %915 = vmatpush1.bf16.msra.mxu0 %v850
  %916 = vmatprep.subr.bf16.mxu0 0
  %917 = vmatpush1.bf16.msra.mxu0 %v851
  %918 = vmatprep.subr.bf16.mxu0 0
  %919 = vmatpush1.bf16.msra.mxu0 %v852
  %920 = vmatprep.subr.bf16.mxu0 0
  %921 = vmatpush1.bf16.msra.mxu0 %v853
  %922 = vmatprep.subr.bf16.mxu0 0
  %923 = vmatpush1.bf16.msra.mxu0 %v854
  %924 = vmatprep.subr.bf16.mxu0 0
  %925 = vmatpush1.bf16.msra.mxu0 %v855
  %926 = vmatprep.subr.bf16.mxu0 0
  %927 = vmatpush1.bf16.msra.mxu0 %v856
  %928 = vmatprep.subr.bf16.mxu0 0
  %929 = vmatpush1.bf16.msra.mxu0 %v857
  %930 = vmatprep.subr.bf16.mxu0 0
  %931 = vmatpush1.bf16.msra.mxu0 %v858
  %932 = vmatprep.subr.bf16.mxu0 0
  %933 = vmatpush1.bf16.msra.mxu0 %v859
  %934 = vmatprep.subr.bf16.mxu0 0
  %935 = vmatpush1.bf16.msra.mxu0 %v860
  %936 = vmatprep.subr.bf16.mxu0 0
  %937 = vmatpush1.bf16.msra.mxu0 %v861
  %938 = vmatprep.subr.bf16.mxu0 0
  %939 = vmatpush1.bf16.msra.mxu0 %v862
  %940 = vmatprep.subr.bf16.mxu0 0
  %941 = vmatpush1.bf16.msra.mxu0 %v863
  %942 = vmatprep.subr.bf16.mxu0 0
  %943 = vmatpush1.bf16.msra.mxu0 %v864
  %944 = vmatprep.subr.bf16.mxu0 0
  %945 = vmatpush1.bf16.msra.mxu0 %v865
  %946 = vmatprep.mubr.bf16.mxu0 %v648
  %947 = vmatmul.mubr.bf16.gmra.mrb[0].mxu0 %v647
  %v948 = vpop.f32.mrb[0].mxu0
  %v949 = vadd.f32 %v720, %v948
  %v950 = vpop.f32.mrb[0].mxu0
  %v951 = vpop.f32.mrb[0].mxu0
  %v952 = vadd.f32 %v720, %v951
  %v953 = vpop.f32.mrb[0].mxu0
  %954 = vdwg.mxu0
  %955 = vmatprep.subr.bf16.mxu0 0
  %956 = vmatpush1.bf16.msra.mxu0 %v866
  %957 = vmatprep.subr.bf16.mxu0 0
  %958 = vmatpush1.bf16.msra.mxu0 %v867
  %959 = vmatprep.subr.bf16.mxu0 0
  %960 = vmatpush1.bf16.msra.mxu0 %v868
  %961 = vmatprep.subr.bf16.mxu0 0
  %962 = vmatpush1.bf16.msra.mxu0 %v869
  %963 = vmatprep.subr.bf16.mxu0 0
  %964 = vmatpush1.bf16.msra.mxu0 %v870
  %965 = vmatprep.subr.bf16.mxu0 0
  %966 = vmatpush1.bf16.msra.mxu0 %v871
  %967 = vmatprep.subr.bf16.mxu0 0
  %968 = vmatpush1.bf16.msra.mxu0 %v872
  %969 = vmatprep.subr.bf16.mxu0 0
  %970 = vmatpush1.bf16.msra.mxu0 %v873
  %971 = vmatprep.subr.bf16.mxu0 0
  %972 = vmatpush1.bf16.msra.mxu0 %v874
  %973 = vmatprep.subr.bf16.mxu0 0
  %974 = vmatpush1.bf16.msra.mxu0 %v875
  %975 = vmatprep.subr.bf16.mxu0 0
  %976 = vmatpush1.bf16.msra.mxu0 %v876
  %977 = vmatprep.subr.bf16.mxu0 0
  %978 = vmatpush1.bf16.msra.mxu0 %v877
  %979 = vmatprep.subr.bf16.mxu0 0
  %980 = vmatpush1.bf16.msra.mxu0 %v878
  %981 = vmatprep.subr.bf16.mxu0 0
  %982 = vmatpush1.bf16.msra.mxu0 %v879
  %983 = vmatprep.subr.bf16.mxu0 0
  %984 = vmatpush1.bf16.msra.mxu0 %v880
  %985 = vmatprep.subr.bf16.mxu0 0
  %986 = vmatpush1.bf16.msra.mxu0 %v881
  %987 = vmatprep.mubr.bf16.mxu0 %v650
  %988 = vmatmul.mubr.bf16.gmra.mrb[0].mxu0 %v649
  %v989 = vpop.f32.mrb[0].mxu0
  %v990 = vadd.f32 %v949, %v989
  %v991 = vpop.f32.mrb[0].mxu0
  %v992 = vpop.f32.mrb[0].mxu0
  %v993 = vadd.f32 %v952, %v992
  %v994 = vpop.f32.mrb[0].mxu0
  %995 = vdwg.mxu0
  %v996 = vmax.f32 %v990, 0.0
  %v997 = vmax.f32 %v993, 0.0
  %v998 = vld [vmem:[%s7] sm:$0x1]
  %v1000 = vlaneseq
  %v1001 = vshrl.u32 %v1000, 7
  %v1002 = vsub.s32 0, %v1001
  %v1003 = vrot.slane %v998, %v1002
  %v1005 = vmul.f32 %v996, %v1003
  %v1006 = vmul.f32 %v997, %v1003
  %vm1007 = vcmask 523264
  %v1008 = vsel %vm1007, %v1005, 0.0
  %1009 = vadd.xlane.f32.xlu0 %v1008
  %v1010 = vpop.xlane.xlu0 %1009
  %v1011 = vsel %vm1007, %v1006, 0.0
  %1012 = vadd.xlane.f32.xlu0 %v1011
  %v1013 = vpop.xlane.xlu0 %1012
  %v1014 = vld [vmem:[#allocation2] sm:$0x1]
  %s1015 = vtos %v1014
  %v1016 = vstv %s1015
  %v1017 = vadd.f32 %v1010, %v1016
  %v1018 = vadd.f32 %v1013, %v1016
  %v1021 = vlaneseq
  %v1022 = vand.u32 %v1021, 127
  %v1023 = vlaneseq
  %v1024 = vshrl.u32 %v1023, 7
  %v1025 = vsub.s32 %v1022, %v1024
  %v1026 = vrot.slane %v1017, %v1025
  %v1027 = vadd.s32 %v1022, 4294967288
  %v1028 = vlaneseq
  %v1029 = vshrl.u32 %v1028, 7
  %v1030 = vsub.s32 %v1027, %v1029
  %v1031 = vrot.slane %v1018, %v1030
  %vm1032 = vcmask 130112
  %v1033 = vsel %vm1032, %v1031, %v1026
  %vm1035 = vcmask 122880
  %1036 = vst.msk [vmem:[%s9] sm:$0x1] %vm1035, %v1033
  // Predicated region
  $region38: #{nn229_forward.1} parent=0 // pred_check
    _
  $region39: #{nn229_forward.1} parent=0 // pred_check_branch
    %1038 = sbr.rel (0) target = $region41
  $region40: #{nn229_forward.1} parent=0 // pred_region
    _
  $region41: #{nn229_forward.1} parent=0 // pred_fallthru
    _
  // Predicated region
  $region42: #{nn229_forward.1} parent=0 // pred_check
    _
  $region43: #{nn229_forward.1} parent=0 // pred_check_branch
    %1040 = sbr.rel (0) target = $region45
  $region44: #{nn229_forward.1} parent=0 // pred_region
    _
  $region45: #{nn229_forward.1} parent=0 // pred_fallthru
    _

</llo_original>
